<compile_context>
chip_gen: v6e
topology: v6e:2x2x1
jax: 0.10.0
libtpu: 0.0.40
codegen_flags: <defaults>
</compile_context>

<pallas_src>
import jax
import jax.numpy as jnp
from jax.experimental import pallas as pl
from jax.experimental.pallas import tpu as pltpu


# ---------------------------------------------------------------------------
# Small helpers
# ---------------------------------------------------------------------------
def _round_up(x: int, m: int) -> int:
    return ((x + m - 1) // m) * m


def _cdiv(a: int, b: int) -> int:
    return -(-a // b)


def _sublane(dtype) -> int:
    """Dtype-native sublane tile: 8 rows (f32), 16 (bf16), 32 (int8/fp8)."""
    return 8 * max(1, 4 // jnp.dtype(dtype).itemsize)


def _largest_aligned_divisor(total: int, target: int, align: int) -> int:
    """Largest multiple of `align` that divides `total` and is <= target."""
    target = max(align, min(target, total))
    d = (target // align) * align
    while d >= align:
        if total % d == 0:
            return d
        d -= align
    return align


def _vmem_capacity_bytes() -> int:
    """Physical VMEM per TensorCore (128 MiB v5e/v6e, 64 MiB v7x)."""
    try:
        return int(pltpu.get_tpu_info().vmem_capacity_bytes)
    except Exception:
        return 64 * 1024 * 1024  # conservative default (v7x per-TC)


# ---------------------------------------------------------------------------
# Kernels
# ---------------------------------------------------------------------------
def _matmul_tiled_kernel(z_ref, w_ref, o_ref, acc_ref):
    """General tiled matmul: grid=(Mt, Nt, Kt), K innermost, f32 accumulator."""

    @pl.when(pl.program_id(2) == 0)
    def _():
        acc_ref[...] = jnp.zeros_like(acc_ref)

    acc_ref[...] += jnp.dot(
        z_ref[...], w_ref[...], preferred_element_type=jnp.float32
    )

    @pl.when(pl.program_id(2) == pl.num_programs(2) - 1)
    def _():
        o_ref[...] = acc_ref[...].astype(o_ref.dtype)


def _matmul_resident_w_kernel(z_ref, w_ref, o_ref):
    """Weight-resident matmul: full K in one shot, weight column block stays in
    VMEM across the (inner) batch-tile loop -> weight read from HBM once."""
    o_ref[...] = jnp.dot(
        z_ref[...], w_ref[...], preferred_element_type=jnp.float32
    ).astype(o_ref.dtype)


# ---------------------------------------------------------------------------
# Wrapper (expects a pre-padded, pre-cast weight; only pads the activations)
# ---------------------------------------------------------------------------
def compress_pallas(
    z: jax.Array,
    w_padded: jax.Array,
    n_out: int,
    *,
    out_dtype=None,
    tm: int | None = None,
    tn: int | None = None,
    tk: int | None = None,
    vmem_limit_bytes: int | None = None,
    resident_budget_bytes: int | None = None,
) -> jax.Array:
    """Compression projection z @ w with a Pallas TPU kernel.

    `w_padded` must already be (K_pad, N_pad) with both dims multiples of 128
    and in the compute dtype (done once in CompressionBase.__init__).
    """
    M, K = z.shape
    K_pad, N_pad = w_padded.shape
    assert K <= K_pad and n_out <= N_pad, "weight padding smaller than inputs"
    out_dtype = out_dtype or z.dtype

    z_item = jnp.dtype(z.dtype).itemsize
    w_item = jnp.dtype(w_padded.dtype).itemsize
    o_item = jnp.dtype(out_dtype).itemsize
    sub = _sublane(z.dtype)

    # --- generation-aware VMEM budget --------------------------------------
    vmem_cap = _vmem_capacity_bytes()
    if vmem_limit_bytes is None:
        vmem_limit_bytes = int(vmem_cap * 0.75)          # leave compiler headroom
    if resident_budget_bytes is None:
        resident_budget_bytes = max(vmem_limit_bytes - (4 << 20), 2 << 20)

    # --- M (sublane) tiling: minimal padding, dtype-native alignment -------
    tm_target = _round_up(max(sub, tm if tm is not None else 512), sub)
    mt = max(1, _cdiv(M, tm_target))
    tm_eff = _round_up(_cdiv(M, mt), sub)
    M_pad = mt * tm_eff

    if (M_pad, K_pad) != (M, K):
        z = jnp.pad(z, ((0, M_pad - M), (0, K_pad - K)))

    # --- advisory cost estimate ---------------------------------------------
    cost = pl.CostEstimate(
        flops=2 * M_pad * N_pad * K_pad,
        transcendentals=0,
        bytes_accessed=(M_pad * K_pad * z_item
                        + K_pad * N_pad * w_item
                        + M_pad * N_pad * o_item),
    )

    # --- resident-weight path selection (full VMEM footprint accounting) ---
    def _resident_footprint(tn_cand: int) -> int:
        wbuf = 1 if tn_cand == N_pad else 2              # Buffered(1) if constant index
        return (wbuf * K_pad * tn_cand * w_item
                + 2 * tm_eff * K_pad * z_item
                + 2 * tm_eff * tn_cand * o_item)

    divisors = [d for d in range(128, N_pad + 1, 128) if N_pad % d == 0]
    divisors.sort(reverse=True)
    fitting = [d for d in divisors if _resident_footprint(d) <= resident_budget_bytes]

    tn_r = None
    if fitting:
        tn_r = fitting[0]
        # With a single M tile, split N so both TensorCores (v7x megacore) get
        # work and the (tm x N) output block stays bounded.
        if mt == 1 and N_pad >= 256 and tn_r == N_pad:
            smaller = [d for d in fitting if d < N_pad]
            if smaller:
                tn_r = smaller[0]

    if tn_r is not None:
        nt = N_pad // tn_r
        if nt == 1:
            # Constant block index: single-buffer (double-buffering buys nothing).
            w_spec = pl.BlockSpec((K_pad, tn_r), lambda j, i: (0, j),
                                  pipeline_mode=pl.Buffered(1))
        else:
            w_spec = pl.BlockSpec((K_pad, tn_r), lambda j, i: (0, j))

        out_p = pl.pallas_call(
            _matmul_resident_w_kernel,
            out_shape=jax.ShapeDtypeStruct((M_pad, N_pad), out_dtype),
            grid_spec=pltpu.PrefetchScalarGridSpec(
                num_scalar_prefetch=0,
                # N outer / M inner: each weight column block is DMA'd exactly
                # once from HBM and reused across every batch tile.
                grid=(nt, mt),
                in_specs=[
                    pl.BlockSpec((tm_eff, K_pad), lambda j, i: (i, 0)),
                    w_spec,
                ],
                out_specs=pl.BlockSpec((tm_eff, tn_r), lambda j, i: (i, j)),
            ),
            compiler_params=pltpu.CompilerParams(
                dimension_semantics=("parallel", "parallel"),
                vmem_limit_bytes=vmem_limit_bytes,
            ),
            cost_estimate=cost,
        )(z, w_padded)
    else:
        # --- general (M, N, K) accumulator pipeline -------------------------
        tn_eff = _largest_aligned_divisor(N_pad, tn if tn is not None else 512, 128)
        tk_eff = _largest_aligned_divisor(K_pad, tk if tk is not None else 512, 128)

        out_p = pl.pallas_call(
            _matmul_tiled_kernel,
            out_shape=jax.ShapeDtypeStruct((M_pad, N_pad), out_dtype),
            grid_spec=pltpu.PrefetchScalarGridSpec(
                num_scalar_prefetch=0,
                grid=(M_pad // tm_eff, N_pad // tn_eff, K_pad // tk_eff),
                in_specs=[
                    pl.BlockSpec((tm_eff, tk_eff), lambda i, j, k: (i, k)),
                    pl.BlockSpec((tk_eff, tn_eff), lambda i, j, k: (k, j)),
                ],
                out_specs=pl.BlockSpec((tm_eff, tn_eff), lambda i, j, k: (i, j)),
                scratch_shapes=[pltpu.VMEM((tm_eff, tn_eff), jnp.float32)],
            ),
            compiler_params=pltpu.CompilerParams(
                dimension_semantics=("parallel", "parallel", "arbitrary"),
                vmem_limit_bytes=vmem_limit_bytes,
            ),
            cost_estimate=cost,
        )(z, w_padded)

    if (M_pad, N_pad) != (M, n_out):
        out_p = out_p[:M, :n_out]
    return out_p


# ---------------------------------------------------------------------------
# Module
# ---------------------------------------------------------------------------
class CompressionBase:
    """JAX/Pallas port of the PyTorch CompressionBase module."""

    def __init__(self, latent_dim: int, compression_level: float = 1.0, *,
                 compute_dtype=jnp.bfloat16, param_dtype=jnp.float32):
        if latent_dim <= 0:
            raise ValueError(f"latent_dim must be positive, got {latent_dim}")
        if compression_level <= 0:
            raise ValueError(
                f"compression_level must be positive, got {compression_level}"
            )
        self.latent_dim = latent_dim
        self.compression_level = compression_level
        self.effective_dim = self._calculate_effective_dim()
        self.compute_dtype = compute_dtype

        # Deterministic synthetic parameter init for the canonical projection.
        key = jax.random.PRNGKey(0)
        self.weight = (
            jax.random.normal(
                key, (self.latent_dim, self.effective_dim), dtype=param_dtype
            )
            / jnp.sqrt(jnp.float32(self.latent_dim)).astype(param_dtype)
        )

        # Static weight prep hoisted out of forward (perf review):
        #   * cast to compute dtype once
        #   * pad K (weight sublane) and N (output lanes) to 128 once
        K_pad = _round_up(self.latent_dim, 128)
        N_pad = _round_up(self.effective_dim, 128)
        w_c = self.weight.astype(compute_dtype)
        self._w_compute = w_c  # unpadded, for the tiny-shape fallback
        if (K_pad, N_pad) != (self.latent_dim, self.effective_dim):
            self._w_padded = jnp.pad(
                w_c,
                ((0, K_pad - self.latent_dim), (0, N_pad - self.effective_dim)),
            )
        else:
            self._w_padded = w_c

    def _calculate_effective_dim(self) -> int:
        return max(1, int(self.latent_dim / self.compression_level))

    def get_compression_rate(self) -> float:
        return float(self.latent_dim) / float(self.effective_dim)

    def forward(self, z: jax.Array, *, force_pallas: bool = False,
                out_dtype=None, small_fallback_elems: int = 1 << 20,
                **kwargs) -> jax.Array:
        out_dtype = out_dtype or z.dtype
        zc = z.astype(self.compute_dtype) if z.dtype != self.compute_dtype else z

        # Tiny-shape fast path: pallas_call dispatch/pipeline overhead would
        # dominate; XLA's fused dot wins and avoids the pad/slice round trip.
        if (not force_pallas
                and z.shape[0] * self.latent_dim * self.effective_dim
                < small_fallback_elems):
            return jnp.dot(
                zc, self._w_compute, preferred_element_type=jnp.float32
            ).astype(out_dtype)

        return compress_pallas(
            zc, self._w_padded, self.effective_dim, out_dtype=out_dtype, **kwargs
        )

    __call__ = forward


# ---------------------------------------------------------------------------
# Demo / correctness checks
# ---------------------------------------------------------------------------
if __name__ == "__main__":
    key = jax.random.PRNGKey(0)

    # --- Case 1: aligned shapes, default bf16 compute, resident path -------
    mod1 = CompressionBase(latent_dim=256, compression_level=2.0)  # eff = 128
    z1 = jax.random.normal(key, (64, 256), dtype=jnp.float32)
    out1 = jax.block_until_ready(mod1(z1, force_pallas=True))
    ref1 = jnp.dot(
        z1.astype(jnp.bfloat16), mod1._w_compute,
        preferred_element_type=jnp.float32,
    )
    assert out1.shape == (64, 128)
    assert jnp.allclose(out1, ref1, atol=1e-2, rtol=1e-2)
    assert mod1.get_compression_rate() == 2.0

    # --- Case 2: unaligned shapes, f32 compute (exercises activation pad) --
    mod2 = CompressionBase(latent_dim=200, compression_level=3.0,  # eff = 66
                           compute_dtype=jnp.float32)
    z2 = jax.random.normal(jax.random.PRNGKey(1), (50, 200), dtype=jnp.float32)
    out2 = jax.block_until_ready(mod2(z2, force_pallas=True))
    ref2 = jnp.dot(z2, mod2.weight, preferred_element_type=jnp.float32)
    assert out2.shape == (50, 66)
    assert jnp.allclose(out2, ref2, atol=1e-3, rtol=1e-3)

    # --- Case 3: force the general tiled (M,N,K) accumulator pipeline ------
    mod3 = CompressionBase(latent_dim=512, compression_level=2.0,  # eff = 256
                           compute_dtype=jnp.float32)
    z3 = jax.random.normal(jax.random.PRNGKey(2), (128, 512), dtype=jnp.float32)
    out3 = jax.block_until_ready(
        mod3(z3, force_pallas=True, tm=128, tn=128, tk=256,
             resident_budget_bytes=0)
    )
    ref3 = jnp.dot(z3, mod3.weight, preferred_element_type=jnp.float32)
    assert out3.shape == (128, 256)
    assert jnp.allclose(out3, ref3, atol=1e-3, rtol=1e-3)

    # --- Case 4: tiny-shape fallback path (plain jnp.dot) ------------------
    mod4 = CompressionBase(latent_dim=32, compression_level=2.0)   # eff = 16
    z4 = jax.random.normal(jax.random.PRNGKey(3), (8, 32), dtype=jnp.float32)
    out4 = jax.block_until_ready(mod4(z4))
    ref4 = jnp.dot(
        z4.astype(jnp.bfloat16), mod4._w_compute,
        preferred_element_type=jnp.float32,
    )
    assert out4.shape == (8, 16)
    assert jnp.allclose(out4, ref4, atol=1e-2, rtol=1e-2)

    print("KERNEL_OK")
</pallas_src>

<mosaic_0001>
module attributes {stable_mosaic.version = 11 : i64} {
  func.func @_matmul_resident_w_kernel(%arg0: i32, %arg1: i32, %arg2: memref<64x256xbf16, #tpu.memory_space<vmem>>, %arg3: memref<256x128xbf16, #tpu.memory_space<vmem>>, %arg4: memref<64x128xf32, #tpu.memory_space<vmem>>) attributes {dimension_semantics = [#tpu.dimension_semantics<parallel>, #tpu.dimension_semantics<parallel>], iteration_bounds = array<i64: 1, 1>, scalar_prefetch = 0 : i64, scratch_operands = 0 : i64, tpu.core_type = #tpu.core_type<tc>, window_params = [{transform_indices = @transform_0, window_bounds = array<i64: 64, 256>}, {pipeline_mode = #tpu.pipeline_mode<synchronous>, transform_indices = @transform_1, window_bounds = array<i64: 256, 128>}, {transform_indices = @transform_2, window_bounds = array<i64: 64, 128>}]} {
    %c0 = arith.constant 0 : index
    %c0_0 = arith.constant 0 : index
    %0 = vector.load %arg2[%c0, %c0_0] : memref<64x256xbf16, #tpu.memory_space<vmem>>, vector<64x256xbf16>
    %c0_1 = arith.constant 0 : index
    %c0_2 = arith.constant 0 : index
    %1 = vector.load %arg3[%c0_1, %c0_2] : memref<256x128xbf16, #tpu.memory_space<vmem>>, vector<256x128xbf16>
    %cst = arith.constant dense<0.000000e+00> : vector<64x128xf32>
    %2 = tpu.matmul %0, %1, %cst {dimension_numbers = #tpu.dot_dimension_numbers<[1], [0], [0], [1], [0, 0, 1, 1], [], []>} : vector<64x256xbf16>, vector<256x128xbf16>, vector<64x128xf32> -> vector<64x128xf32>
    %c0_3 = arith.constant 0 : index
    %c0_4 = arith.constant 0 : index
    %3 = vector.load %arg4[%c0_3, %c0_4] : memref<64x128xf32, #tpu.memory_space<vmem>>, vector<64x128xf32>
    tpu.vector_store %arg4[%c0_3, %c0_4], %2 {strides = array<i32>} : memref<64x128xf32, #tpu.memory_space<vmem>>, vector<64x128xf32>,
    return
  }
  func.func @transform_0(%arg0: i32, %arg1: i32) -> (i32, i32) {
    %c0_i32 = arith.constant 0 : i32
    %c0_i32_0 = arith.constant 0 : i32
    return %arg1, %c0_i32 : i32, i32
  }
  func.func @transform_1(%arg0: i32, %arg1: i32) -> (i32, i32) {
    %c0_i32 = arith.constant 0 : i32
    %c0_i32_0 = arith.constant 0 : i32
    return %c0_i32, %arg0 : i32, i32
  }
  func.func @transform_2(%arg0: i32, %arg1: i32) -> (i32, i32) {
    %c0_i32 = arith.constant 0 : i32
    return %arg1, %arg0 : i32, i32
  }
}

</mosaic_0001>

<llo_original>
// kernel: tpu_custom_call.1
$region0: #{tpu_custom_call.1}
  #allocation0 [shape = 'u32[]', space=smem, size = 0x4, offset = 0x4, fixed_abs, tag = 'smem constant byte address 0x4 - core index']
  #allocation1 [shape = 'u32[144,128]{1,0:T(1,128)}', space=vmem, size = 0x12000, scoped, tag = 'internal scratch']
  %s0 = inlined_call_operand.hbm [shape: bf16[64,256], index: 0, kind: input, shape index: {}]
  %s1 = inlined_call_operand.hbm [shape: bf16[256,128], index: 1, kind: input, shape index: {}]
  %s2 = inlined_call_operand.hbm [shape: f32[64,128], index: 2, kind: output, shape index: {}]
  %s3 = sld [smem:[#allocation0]]
  $region26: #{tpu_custom_call.1} parent=0
    _
  %s5 = ssub.s32 1, %s3
  %s6 = scalar_select 0, %s5, %s3
  $region1: #{tpu_custom_call.1} parent=0
    #allocation2 [shape = 'u8[32768]{0}', space=vmem, size = 0x8000, scoped, tag = 'input window, operand 0, single buffered']
    #allocation3 [shape = 's32[1]{0}', space=sflag, size = 0x4, scoped, tag = 'scoped memory for tpu_custom_call.1']
    #allocation4 [shape = 's32[1]{0}', space=sflag, size = 0x4, scoped, tag = 'scoped memory for tpu_custom_call.1']
    #allocation5 [shape = 'u8[65536]{0}', space=vmem, size = 0x10000, scoped, tag = 'input window, operand 1, single buffered']
    #allocation6 [shape = 's32[1]{0}', space=sflag, size = 0x4, scoped, tag = 'scoped memory for tpu_custom_call.1']
    #allocation7 [shape = 'u8[32768]{0}', space=vmem, size = 0x8000, scoped, tag = 'output window, operand 0, single buffered']
    %7 = vsyncpa [#allocation3], 0
    %8 = vsyncpa [#allocation6], 0
    %9 = vsyncpa [#allocation4], 0
    // Predicated region
    $region2: #{tpu_custom_call.1} parent=1 // pred_check
      _
    $region3: #{tpu_custom_call.1} parent=1 // pred_check_branch
      %11 = sbr.rel (0) target = $region5
    $region4: #{tpu_custom_call.1} parent=1 // pred_region
      %s13 = ssub.s32 1024, 1024
      %14 = vsyncadd [#allocation3], %s13
      %s15 = sshll.u32 [#allocation2], 4
      %s16 = int_to_ptr.vmem [resolvable:$true] %s15
      %21 = dma.hbm_to_vmem [thread:$0]  %s0, 1024, %s16, [#allocation3], 128, 128, 8
    $region5: #{tpu_custom_call.1} parent=1 // pred_fallthru
      _
    // Predicated region
    $region6: #{tpu_custom_call.1} parent=1 // pred_check
      _
    $region7: #{tpu_custom_call.1} parent=1 // pred_check_branch
      %23 = sbr.rel (0) target = $region9
    $region8: #{tpu_custom_call.1} parent=1 // pred_region
      %s25 = ssub.s32 2048, 2048
      %26 = vsyncadd [#allocation6], %s25
      %s27 = sshll.u32 [#allocation5], 4
      %s28 = int_to_ptr.vmem [resolvable:$true] %s27
      %33 = dma.hbm_to_vmem [thread:$0]  %s1, 2048, %s28, [#allocation6], 64, 64, 4
    $region9: #{tpu_custom_call.1} parent=1 // pred_fallthru
      _
    // Predicated region
    $region10: #{tpu_custom_call.1} parent=1 // pred_check
      _
    $region11: #{tpu_custom_call.1} parent=1 // pred_check_branch
      %35 = sbr.rel (0) target = $region13
    $region12: #{tpu_custom_call.1} parent=1 // pred_region
      %36 = dma.done [#allocation3], 1024
    $region13: #{tpu_custom_call.1} parent=1 // pred_fallthru
      _
    // Predicated region
    $region14: #{tpu_custom_call.1} parent=1 // pred_check
      _
    $region15: #{tpu_custom_call.1} parent=1 // pred_check_branch
      %38 = sbr.rel (0) target = $region17
    $region16: #{tpu_custom_call.1} parent=1 // pred_region
      %39 = dma.done [#allocation6], 2048
    $region17: #{tpu_custom_call.1} parent=1 // pred_fallthru
      _
    %v41 = vld [vmem:[#allocation2] sm:$0xff]
    %v42 = vld [vmem:[#allocation2 + $0x8] sm:$0xff]
    %v43 = vld [vmem:[#allocation2 + $0x10] sm:$0xff]
    %v44 = vld [vmem:[#allocation2 + $0x18] sm:$0xff]
    %v45 = vld [vmem:[#allocation2 + $0x20] sm:$0xff]
    %v46 = vld [vmem:[#allocation2 + $0x28] sm:$0xff]
    %v47 = vld [vmem:[#allocation2 + $0x30] sm:$0xff]
    %v48 = vld [vmem:[#allocation2 + $0x38] sm:$0xff]
    %v49 = vld [vmem:[#allocation5] sm:$0xf]
    %v50 = vld [vmem:[#allocation5 + $0x4] sm:$0xf]
    %v51 = vld [vmem:[#allocation5 + $0x8] sm:$0xf]
    %v52 = vld [vmem:[#allocation5 + $0xc] sm:$0xf]
    %v53 = vld [vmem:[#allocation5 + $0x10] sm:$0xf]
    %v54 = vld [vmem:[#allocation5 + $0x14] sm:$0xf]
    %v55 = vld [vmem:[#allocation5 + $0x18] sm:$0xf]
    %v56 = vld [vmem:[#allocation5 + $0x1c] sm:$0xf]
    %v57 = vld [vmem:[#allocation5 + $0x20] sm:$0xf]
    %v58 = vld [vmem:[#allocation5 + $0x24] sm:$0xf]
    %v59 = vld [vmem:[#allocation5 + $0x28] sm:$0xf]
    %v60 = vld [vmem:[#allocation5 + $0x2c] sm:$0xf]
    %v61 = vld [vmem:[#allocation5 + $0x30] sm:$0xf]
    %v62 = vld [vmem:[#allocation5 + $0x34] sm:$0xf]
    %v63 = vld [vmem:[#allocation5 + $0x38] sm:$0xf]
    %v64 = vld [vmem:[#allocation5 + $0x3c] sm:$0xf]
    %v65 = vld [vmem:[#allocation5 + $0x40] sm:$0xf]
    %v66 = vld [vmem:[#allocation5 + $0x44] sm:$0xf]
    %v67 = vld [vmem:[#allocation5 + $0x48] sm:$0xf]
    %v68 = vld [vmem:[#allocation5 + $0x4c] sm:$0xf]
    %v69 = vld [vmem:[#allocation5 + $0x50] sm:$0xf]
    %v70 = vld [vmem:[#allocation5 + $0x54] sm:$0xf]
    %v71 = vld [vmem:[#allocation5 + $0x58] sm:$0xf]
    %v72 = vld [vmem:[#allocation5 + $0x5c] sm:$0xf]
    %v73 = vld [vmem:[#allocation5 + $0x60] sm:$0xf]
    %v74 = vld [vmem:[#allocation5 + $0x64] sm:$0xf]
    %v75 = vld [vmem:[#allocation5 + $0x68] sm:$0xf]
    %v76 = vld [vmem:[#allocation5 + $0x6c] sm:$0xf]
    %v77 = vld [vmem:[#allocation5 + $0x70] sm:$0xf]
    %v78 = vld [vmem:[#allocation5 + $0x74] sm:$0xf]
    %v79 = vld [vmem:[#allocation5 + $0x78] sm:$0xf]
    %v80 = vld [vmem:[#allocation5 + $0x7c] sm:$0xf]
    %v89 = vunpack.c.l.b16 %v41
    %v90 = vunpack.c.h.b16 %v41
    %v91 = vunpack.c.l.b16 %v42
    %v92 = vunpack.c.h.b16 %v42
    %v93 = vunpack.c.l.b16 %v43
    %v94 = vunpack.c.h.b16 %v43
    %v95 = vunpack.c.l.b16 %v44
    %v96 = vunpack.c.h.b16 %v44
    %v97 = vunpack.c.l.b16 %v45
    %v98 = vunpack.c.h.b16 %v45
    %v99 = vunpack.c.l.b16 %v46
    %v100 = vunpack.c.h.b16 %v46
    %v101 = vunpack.c.l.b16 %v47
    %v102 = vunpack.c.h.b16 %v47
    %v103 = vunpack.c.l.b16 %v48
    %v104 = vunpack.c.h.b16 %v48
    %v105 = vpack.c.b16 %v91, %v89
    %v106 = vpack.c.b16 %v92, %v90
    %v107 = vpack.c.b16 %v95, %v93
    %v108 = vpack.c.b16 %v96, %v94
    %v109 = vpack.c.b16 %v99, %v97
    %v110 = vpack.c.b16 %v100, %v98
    %v111 = vpack.c.b16 %v103, %v101
    %v112 = vpack.c.b16 %v104, %v102
    %v153 = vunpack.c.l.b16 %v49
    %v154 = vunpack.c.l.b16 %v50
    %v155 = vunpack.c.l.b16 %v51
    %v156 = vunpack.c.l.b16 %v52
    %v157 = vunpack.c.l.b16 %v53
    %v158 = vunpack.c.l.b16 %v54
    %v159 = vunpack.c.l.b16 %v55
    %v160 = vunpack.c.l.b16 %v56
    %v161 = vunpack.c.l.b16 %v57
    %v162 = vunpack.c.l.b16 %v58
    %v163 = vunpack.c.l.b16 %v59
    %v164 = vunpack.c.l.b16 %v60
    %v165 = vunpack.c.l.b16 %v61
    %v166 = vunpack.c.l.b16 %v62
    %v167 = vunpack.c.l.b16 %v63
    %v168 = vunpack.c.l.b16 %v64
    %v169 = vunpack.c.l.b16 %v65
    %v170 = vunpack.c.l.b16 %v66
    %v171 = vunpack.c.l.b16 %v67
    %v172 = vunpack.c.l.b16 %v68
    %v173 = vunpack.c.l.b16 %v69
    %v174 = vunpack.c.l.b16 %v70
    %v175 = vunpack.c.l.b16 %v71
    %v176 = vunpack.c.l.b16 %v72
    %v177 = vunpack.c.l.b16 %v73
    %v178 = vunpack.c.l.b16 %v74
    %v179 = vunpack.c.l.b16 %v75
    %v180 = vunpack.c.l.b16 %v76
    %v181 = vunpack.c.l.b16 %v77
    %v182 = vunpack.c.l.b16 %v78
    %v183 = vunpack.c.l.b16 %v79
    %v184 = vunpack.c.l.b16 %v80
    %v185 = vpack.c.b16 %v154, %v153
    %v186 = vpack.c.b16 %v156, %v155
    %v187 = vpack.c.b16 %v158, %v157
    %v188 = vpack.c.b16 %v160, %v159
    %v189 = vpack.c.b16 %v162, %v161
    %v190 = vpack.c.b16 %v164, %v163
    %v191 = vpack.c.b16 %v166, %v165
    %v192 = vpack.c.b16 %v168, %v167
    %v193 = vpack.c.b16 %v170, %v169
    %v194 = vpack.c.b16 %v172, %v171
    %v195 = vpack.c.b16 %v174, %v173
    %v196 = vpack.c.b16 %v176, %v175
    %v197 = vpack.c.b16 %v178, %v177
    %v198 = vpack.c.b16 %v180, %v179
    %v199 = vpack.c.b16 %v182, %v181
    %v200 = vpack.c.b16 %v184, %v183
    %217 = vmatprep.subr.bf16.mxu0 0
    %218 = vmatpush1.bf16.msra.mxu0 %v192
    %219 = vmatprep.subr.bf16.mxu0 0
    %220 = vmatpush1.bf16.msra.mxu0 %v191
    %221 = vmatprep.subr.bf16.mxu0 0
    %222 = vmatpush1.bf16.msra.mxu0 %v190
    %223 = vmatprep.subr.bf16.mxu0 0
    %224 = vmatpush1.bf16.msra.mxu0 %v189
    %225 = vmatprep.subr.bf16.mxu0 0
    %226 = vmatpush1.bf16.msra.mxu0 %v188
    %227 = vmatprep.subr.bf16.mxu0 0
    %228 = vmatpush1.bf16.msra.mxu0 %v187
    %229 = vmatprep.subr.bf16.mxu0 0
    %230 = vmatpush1.bf16.msra.mxu0 %v186
    %231 = vmatprep.subr.bf16.mxu0 0
    %232 = vmatpush1.bf16.msra.mxu0 %v185
    %233 = vmatprep.subr.bf16.mxu0 0
    %234 = vmatpush2.bf16.msra.mxu0 %v200
    %235 = vmatprep.subr.bf16.mxu0 0
    %236 = vmatpush2.bf16.msra.mxu0 %v199
    %237 = vmatprep.subr.bf16.mxu0 0
    %238 = vmatpush2.bf16.msra.mxu0 %v198
    %239 = vmatprep.subr.bf16.mxu0 0
    %240 = vmatpush2.bf16.msra.mxu0 %v197
    %241 = vmatprep.subr.bf16.mxu0 0
    %242 = vmatpush2.bf16.msra.mxu0 %v196
    %243 = vmatprep.subr.bf16.mxu0 0
    %244 = vmatpush2.bf16.msra.mxu0 %v195
    %245 = vmatprep.subr.bf16.mxu0 0
    %246 = vmatpush2.bf16.msra.mxu0 %v194
    %247 = vmatprep.subr.bf16.mxu0 0
    %248 = vmatpush2.bf16.msra.mxu0 %v193
    %249 = vmatprep.mubr.bf16.mxu0 %v106
    %250 = vmatmul.mubr.bf16.gmra.mxu0 %v105
    %v251 = vpop.f32.mrf.mxu0
    %v252 = vadd.f32 0.0, %v251
    %v253 = vpop.f32.mrf.mxu0
    %v254 = vpop.f32.mrf.mxu0
    %v255 = vadd.f32 0.0, %v254
    %v256 = vpop.f32.mrf.mxu0
    %257 = vmatprep.mubr.bf16.mxu0 %v108
    %258 = vmatmul.mubr.bf16.gmra.mxu0 %v107
    %v259 = vpop.f32.mrf.mxu0
    %v260 = vadd.f32 0.0, %v259
    %v261 = vpop.f32.mrf.mxu0
    %v262 = vpop.f32.mrf.mxu0
    %v263 = vadd.f32 0.0, %v262
    %v264 = vpop.f32.mrf.mxu0
    %265 = vmatprep.mubr.bf16.mxu0 %v110
    %266 = vmatmul.mubr.bf16.gmra.mxu0 %v109
    %v267 = vpop.f32.mrf.mxu0
    %v268 = vadd.f32 0.0, %v267
    %v269 = vpop.f32.mrf.mxu0
    %v270 = vpop.f32.mrf.mxu0
    %v271 = vadd.f32 0.0, %v270
    %v272 = vpop.f32.mrf.mxu0
    %273 = vmatprep.mubr.bf16.mxu0 %v112
    %274 = vmatmul.mubr.bf16.gmra.mxu0 %v111
    %v275 = vpop.f32.mrf.mxu0
    %v276 = vadd.f32 0.0, %v275
    %v277 = vpop.f32.mrf.mxu0
    %v278 = vpop.f32.mrf.mxu0
    %v279 = vadd.f32 0.0, %v278
    %v280 = vpop.f32.mrf.mxu0
    %281 = vdwg.mxu0
    %282 = vst [vmem:[#allocation7] sm:$0xff] %v252
    %283 = vst [vmem:[#allocation7 + $0x8] sm:$0xff] %v255
    %284 = vst [vmem:[#allocation7 + $0x10] sm:$0xff] %v260
    %285 = vst [vmem:[#allocation7 + $0x18] sm:$0xff] %v263
    %286 = vst [vmem:[#allocation7 + $0x20] sm:$0xff] %v268
    %287 = vst [vmem:[#allocation7 + $0x28] sm:$0xff] %v271
    %288 = vst [vmem:[#allocation7 + $0x30] sm:$0xff] %v276
    %289 = vst [vmem:[#allocation7 + $0x38] sm:$0xff] %v279
    // Predicated region
    $region18: #{tpu_custom_call.1} parent=1 // pred_check
      _
    $region19: #{tpu_custom_call.1} parent=1 // pred_check_branch
      %291 = sbr.rel (0) target = $region21
    $region20: #{tpu_custom_call.1} parent=1 // pred_region
      %s293 = ssub.s32 1024, 1024
      %294 = vsyncadd [#allocation4], %s293
      %s295 = sshll.u32 [#allocation7], 4
      %s296 = int_to_ptr.vmem [resolvable:$true] %s295
      %301 = dma.vmem_to_hbm [thread:$0]  %s296, 1024, %s2, [#allocation4], 128, 128, 8
    $region21: #{tpu_custom_call.1} parent=1 // pred_fallthru
      _
    // Predicated region
    $region22: #{tpu_custom_call.1} parent=1 // pred_check
      _
    $region23: #{tpu_custom_call.1} parent=1 // pred_check_branch
      %303 = sbr.rel (0) target = $region25
    $region24: #{tpu_custom_call.1} parent=1 // pred_region
      %304 = dma.done [#allocation4], 1024
    $region25: #{tpu_custom_call.1} parent=1 // pred_fallthru
      _
    %305 = vsyncpa [#allocation3], 1
    %306 = vsyncpa [#allocation6], 1
    %307 = vsyncpa [#allocation4], 1

</llo_original>
